<compile_context>
chip_gen: v6e
topology: v6e:2x2x1
jax: 0.10.0
libtpu: 0.0.40
codegen_flags: <defaults>
</compile_context>

<pallas_src>
import functools

import jax
import jax.numpy as jnp
from jax.experimental import pallas as pl
from jax.experimental.pallas import tpu as pltpu

block_size = 256
dropout_p = 0.2
n_embed = 384


def _head_kernel(x_ref, w_ref, bias_ref, bits_ref, o_ref, *, bt, p, scale):
    """One grid step == `bt` batch elements.

    x_ref   : (bt, T, C)  VMEM   input activations (fp32)
    w_ref   : (C, 3H)     VMEM   fused [Wq | Wk | Wv] (bf16)
    bias_ref: (T, T)      VMEM   causal additive bias (0 below diag, -inf above)
    bits_ref: (bt, T, T)  VMEM   uint32 random bits for dropout
    o_ref   : (bt, T, H)  VMEM   output (fp32)
    """
    H = w_ref.shape[1] // 3
    keep_scale = (1.0 / (1.0 - p)) if p > 0.0 else 1.0
    # keep an attention weight iff bits < (1-p) * 2**32  (unsigned compare)
    thresh = jnp.uint32(min(int(round((1.0 - p) * 4294967296.0)), 4294967295))

    w = w_ref[...]  # (C, 3H) bf16, small; hoisted out of the batch loop

    def body(i, carry):
        x = x_ref[i].astype(jnp.bfloat16)                       # (T, C)

        # Fused q/k/v projection: one MXU pass, fp32 accumulation.
        qkv = jnp.dot(x, w, preferred_element_type=jnp.float32)  # (T, 3H)
        q = qkv[:, 0 * H:1 * H].astype(jnp.bfloat16)
        k = qkv[:, 1 * H:2 * H].astype(jnp.bfloat16)
        v = qkv[:, 2 * H:3 * H].astype(jnp.bfloat16)

        # Attention logits: contract trailing H of both operands (no k.T materialization).
        s = jax.lax.dot_general(
            q, k, (((1,), (1,)), ((), ())),
            preferred_element_type=jnp.float32)                  # (T, T)
        s = s * scale + bias_ref[...]                            # causal mask (0 / -inf)

        # Numerically stable softmax, kept un-normalized; normalization and the
        # dropout rescale are folded into a single per-row factor applied post-matmul.
        m = jnp.max(s, axis=-1, keepdims=True)
        e = jnp.exp(s - m)                                       # masked entries -> 0
        denom = jnp.sum(e, axis=-1, keepdims=True)
        inv = pl.reciprocal(denom, approx=True) * keep_scale     # (T, 1)

        if p > 0.0:
            e = jnp.where(bits_ref[i] < thresh, e, 0.0)          # dropout on attn weights

        out = jnp.dot(e.astype(jnp.bfloat16), v,
                      preferred_element_type=jnp.float32)        # (T, H)
        o_ref[i] = (out * inv).astype(o_ref.dtype)
        return carry

    jax.lax.fori_loop(0, bt, body, None)


def head_forward(x, w_qkv, *, p=dropout_p, seed=0, batch_block=8):
    """x: (B, T, C) float32; w_qkv: (C, 3H) = [Wq | Wk | Wv]. Returns (B, T, H) float32."""
    B, T, C = x.shape
    three_h = w_qkv.shape[1]
    assert three_h % 3 == 0
    H = three_h // 3
    assert C == n_embed and T <= block_size
    scale = C ** (-0.5)

    # Largest divisor of B that is <= batch_block (batch elements per grid step).
    bt = max(d for d in range(1, min(batch_block, B) + 1) if B % d == 0)

    # Causal mask as an additive bias, computed once (not per grid step in-kernel).
    tril = jnp.tril(jnp.ones((T, T), dtype=bool))
    bias = jnp.where(tril, 0.0, -jnp.inf).astype(jnp.float32)

    # Dropout randomness from the standard JAX PRNG (deterministic per seed).
    # TODO(synk): not bit-identical to torch's dropout RNG stream (only the distribution matches).
    bits = jax.random.bits(jax.random.PRNGKey(seed), (B, T, T), dtype=jnp.uint32)

    kernel = functools.partial(_head_kernel, bt=bt, p=float(p), scale=float(scale))

    return pl.pallas_call(
        kernel,
        out_shape=jax.ShapeDtypeStruct((B, T, H), jnp.float32),
        grid=(B // bt,),
        in_specs=[
            pl.BlockSpec((bt, T, C), lambda b: (b, 0, 0)),
            pl.BlockSpec((C, three_h), lambda b: (0, 0)),
            pl.BlockSpec((T, T), lambda b: (0, 0)),
            pl.BlockSpec((bt, T, T), lambda b: (b, 0, 0)),
        ],
        out_specs=pl.BlockSpec((bt, T, H), lambda b: (b, 0, 0)),
        compiler_params=pltpu.CompilerParams(
            # No stateful RNG carry across steps anymore -> safe to shard the batch
            # grid axis across TensorCores (v7x megacore); harmless on v5e/v6e.
            dimension_semantics=("parallel",),
        ),
    )(x, w_qkv.astype(jnp.bfloat16), bias, bits)
    # TODO(synk): a single 16-wide head forces masked (vst.msk) stores; fusing e.g.
    # 8 heads (8*16 = 128 lanes) into one kernel would make the output lane-dense.


def head_reference(x, w_qkv):
    """Pure-JAX fp32 reference (dropout disabled / eval mode)."""
    B, T, C = x.shape
    H = w_qkv.shape[1] // 3
    q = x @ w_qkv[:, 0 * H:1 * H]
    k = x @ w_qkv[:, 1 * H:2 * H]
    v = x @ w_qkv[:, 2 * H:3 * H]
    wei = jnp.einsum("btd,bsd->bts", q, k) * C ** (-0.5)
    mask = jnp.tril(jnp.ones((T, T), dtype=bool))
    wei = jnp.where(mask[None], wei, -jnp.inf)
    wei = jax.nn.softmax(wei, axis=-1)
    return wei @ v


if __name__ == "__main__":
    B, T, C = 2, 8, n_embed
    head_size = 16

    key = jax.random.PRNGKey(0)
    k_xin, k_xrand, k_w = jax.random.split(key, 3)

    # The module accepts an input x of shape (B, T, C) ...
    x_in = jax.random.normal(k_xin, (B, T, C), dtype=jnp.float32)
    # ... but its forward immediately overwrites it with torch.randn(B, T, C).
    # Mirror that deterministically:
    del x_in
    x = jax.random.normal(k_xrand, (B, T, C), dtype=jnp.float32)

    # Fused [Wq | Wk | Wv] stored transposed: (C, 3H), matching nn.Linear(n_embed, head_size, bias=False).
    w_qkv = jax.random.normal(k_w, (C, 3 * head_size), dtype=jnp.float32) * 0.02

    # Correctness check with dropout disabled (eval-mode semantics).
    # Tolerance accounts for bf16 MXU operands + approx reciprocal vs the fp32 reference.
    out_nodrop = head_forward(x, w_qkv, p=0.0)
    ref = head_reference(x, w_qkv)
    assert out_nodrop.shape == (B, T, head_size)
    assert jnp.allclose(out_nodrop, ref, atol=2e-2, rtol=2e-2), \
        float(jnp.max(jnp.abs(out_nodrop - ref)))

    # Training-mode run with dropout p=0.2 (deterministic given seed).
    out = head_forward(x, w_qkv, p=dropout_p, seed=0)
    jax.block_until_ready(out)
    assert out.shape == (B, T, head_size)
    assert bool(jnp.all(jnp.isfinite(out)))

    print("KERNEL_OK")
</pallas_src>

<mosaic_0001>
module attributes {stable_mosaic.version = 11 : i64} {
  func.func @_head_kernel(%arg0: i32, %arg1: memref<2x8x384xf32, #tpu.memory_space<vmem>>, %arg2: memref<384x48xbf16, #tpu.memory_space<vmem>>, %arg3: memref<8x8xf32, #tpu.memory_space<vmem>>, %arg4: memref<2x8x8xi32, #tpu.memory_space<vmem>>, %arg5: memref<2x8x16xf32, #tpu.memory_space<vmem>>) attributes {dimension_semantics = [#tpu.dimension_semantics<parallel>], iteration_bounds = array<i64: 1>, scalar_prefetch = 0 : i64, scratch_operands = 0 : i64, tpu.core_type = #tpu.core_type<tc>, window_params = [{transform_indices = @transform_0, window_bounds = array<i64: 2, 8, 384>}, {pipeline_mode = #tpu.pipeline_mode<synchronous>, transform_indices = @transform_1, window_bounds = array<i64: 384, 48>}, {pipeline_mode = #tpu.pipeline_mode<synchronous>, transform_indices = @transform_2, window_bounds = array<i64: 8, 8>}, {transform_indices = @transform_3, window_bounds = array<i64: 2, 8, 8>}, {transform_indices = @transform_4, window_bounds = array<i64: 2, 8, 16>}]} {
    %c0 = arith.constant 0 : index
    %c0_0 = arith.constant 0 : index
    %0 = vector.load %arg2[%c0, %c0_0] : memref<384x48xbf16, #tpu.memory_space<vmem>>, vector<384x48xbf16>
    %c0_i32 = arith.constant 0 : i32
    %c2_i32 = arith.constant 2 : i32
    %1 = arith.addi %c0_i32, %c2_i32 : i32
    %c1_i32 = arith.constant 1 : i32
    scf.for %arg6 = %c0_i32 to %1 step %c1_i32  : i32 {
      %2 = arith.index_cast %arg6 : i32 to index
      %c0_2 = arith.constant 0 : index
      %c0_3 = arith.constant 0 : index
      %3 = vector.load %arg1[%2, %c0_2, %c0_3] : memref<2x8x384xf32, #tpu.memory_space<vmem>>, vector<1x8x384xf32>
      %4 = vector.shape_cast %3 : vector<1x8x384xf32> to vector<8x384xf32>
      %5 = arith.truncf %4 : vector<8x384xf32> to vector<8x384xbf16>
      %cst = arith.constant dense<0.000000e+00> : vector<8x48xf32>
      %6 = tpu.matmul %5, %0, %cst {dimension_numbers = #tpu.dot_dimension_numbers<[1], [0], [0], [1], [0, 0, 1, 1], [], []>} : vector<8x384xbf16>, vector<384x48xbf16>, vector<8x48xf32> -> vector<8x48xf32>
      %7 = vector.extract_strided_slice %6 {offsets = [0, 0], sizes = [8, 16], strides = [1, 1]} : vector<8x48xf32> to vector<8x16xf32>
      %8 = arith.truncf %7 : vector<8x16xf32> to vector<8x16xbf16>
      %9 = vector.extract_strided_slice %6 {offsets = [0, 16], sizes = [8, 16], strides = [1, 1]} : vector<8x48xf32> to vector<8x16xf32>
      %10 = arith.truncf %9 : vector<8x16xf32> to vector<8x16xbf16>
      %11 = vector.extract_strided_slice %6 {offsets = [0, 32], sizes = [8, 16], strides = [1, 1]} : vector<8x48xf32> to vector<8x16xf32>
      %12 = arith.truncf %11 : vector<8x16xf32> to vector<8x16xbf16>
      %cst_4 = arith.constant dense<0.000000e+00> : vector<8x8xf32>
      %13 = tpu.matmul %8, %10, %cst_4 {dimension_numbers = #tpu.dot_dimension_numbers<[1], [1], [0], [0], [0, 0, 1, 0], [], []>} : vector<8x16xbf16>, vector<8x16xbf16>, vector<8x8xf32> -> vector<8x8xf32>
      %cst_5 = arith.constant 0.0510310382 : f32
      %14 = vector.broadcast %cst_5 : f32 to vector<8x8xf32>
      %15 = arith.mulf %13, %14 : vector<8x8xf32>
      %c0_6 = arith.constant 0 : index
      %c0_7 = arith.constant 0 : index
      %16 = vector.load %arg3[%c0_6, %c0_7] : memref<8x8xf32, #tpu.memory_space<vmem>>, vector<8x8xf32>
      %17 = arith.addf %15, %16 : vector<8x8xf32>
      %cst_8 = arith.constant dense<0xFF800000> : vector<8xf32>
      %18 = vector.multi_reduction <maximumf>, %17, %cst_8 [1] : vector<8x8xf32> to vector<8xf32>
      %19 = vector.shape_cast %18 : vector<8xf32> to vector<8x1xf32>
      %20 = vector.broadcast %19 : vector<8x1xf32> to vector<8x8xf32>
      %21 = arith.subf %17, %20 : vector<8x8xf32>
      %22 = math.exp %21 : vector<8x8xf32>
      %cst_9 = arith.constant dense<0.000000e+00> : vector<8xf32>
      %23 = vector.multi_reduction <add>, %22, %cst_9 [1] : vector<8x8xf32> to vector<8xf32>
      %24 = vector.shape_cast %23 : vector<8xf32> to vector<8x1xf32>
      %25 = tpu.reciprocal %24 {approx = true} : vector<8x1xf32> -> vector<8x1xf32>
      %cst_10 = arith.constant 1.000000e+00 : f32
      %26 = vector.broadcast %cst_10 : f32 to vector<8x1xf32>
      %27 = arith.mulf %25, %26 : vector<8x1xf32>
      %28 = arith.truncf %22 : vector<8x8xf32> to vector<8x8xbf16>
      %cst_11 = arith.constant dense<0.000000e+00> : vector<8x16xf32>
      %29 = tpu.matmul %28, %12, %cst_11 {dimension_numbers = #tpu.dot_dimension_numbers<[1], [0], [0], [1], [0, 0, 1, 1], [], []>} : vector<8x8xbf16>, vector<8x16xbf16>, vector<8x16xf32> -> vector<8x16xf32>
      %30 = vector.broadcast %27 : vector<8x1xf32> to vector<8x16xf32>
      %31 = arith.mulf %29, %30 : vector<8x16xf32>
      %32 = arith.index_cast %arg6 : i32 to index
      %c0_12 = arith.constant 0 : index
      %c0_13 = arith.constant 0 : index
      %33 = vector.load %arg5[%32, %c0_12, %c0_13] : memref<2x8x16xf32, #tpu.memory_space<vmem>>, vector<1x8x16xf32>
      %34 = vector.shape_cast %33 : vector<1x8x16xf32> to vector<8x16xf32>
      %35 = vector.shape_cast %31 : vector<8x16xf32> to vector<1x8x16xf32>
      tpu.vector_store %arg5[%32, %c0_12, %c0_13], %35 {strides = array<i32>} : memref<2x8x16xf32, #tpu.memory_space<vmem>>, vector<1x8x16xf32>,
    }
    %c2_i32_1 = arith.constant 2 : i32
    return
  }
  func.func @transform_0(%arg0: i32) -> (i32, i32, i32) {
    %c0_i32 = arith.constant 0 : i32
    %c0_i32_0 = arith.constant 0 : i32
    %c0_i32_1 = arith.constant 0 : i32
    return %arg0, %c0_i32, %c0_i32_0 : i32, i32, i32
  }
  func.func @transform_1(%arg0: i32) -> (i32, i32) {
    %c0_i32 = arith.constant 0 : i32
    %c0_i32_0 = arith.constant 0 : i32
    %c0_i32_1 = arith.constant 0 : i32
    return %c0_i32, %c0_i32_0 : i32, i32
  }
  func.func @transform_2(%arg0: i32) -> (i32, i32) {
    %c0_i32 = arith.constant 0 : i32
    %c0_i32_0 = arith.constant 0 : i32
    %c0_i32_1 = arith.constant 0 : i32
    return %c0_i32, %c0_i32_0 : i32, i32
  }
  func.func @transform_3(%arg0: i32) -> (i32, i32, i32) {
    %c0_i32 = arith.constant 0 : i32
    %c0_i32_0 = arith.constant 0 : i32
    %c0_i32_1 = arith.constant 0 : i32
    return %arg0, %c0_i32, %c0_i32_0 : i32, i32, i32
  }
  func.func @transform_4(%arg0: i32) -> (i32, i32, i32) {
    %c0_i32 = arith.constant 0 : i32
    %c0_i32_0 = arith.constant 0 : i32
    %c0_i32_1 = arith.constant 0 : i32
    return %arg0, %c0_i32, %c0_i32_0 : i32, i32, i32
  }
}

</mosaic_0001>

<llo_original>
// kernel: tpu_custom_call.1
$region0: #{tpu_custom_call.1}
  #allocation0 [shape = 'u32[]', space=smem, size = 0x4, offset = 0x4, fixed_abs, tag = 'smem constant byte address 0x4 - core index']
  #allocation1 [shape = 'u32[144,128]{1,0:T(1,128)}', space=vmem, size = 0x12000, scoped, tag = 'internal scratch']
  %s0 = inlined_call_operand.vmem [shape: f32[2,8,384], index: 0, kind: input, shape index: {}]
  %s1 = inlined_call_operand.vmem [shape: bf16[384,48], index: 1, kind: input, shape index: {}]
  %s2 = inlined_call_operand.vmem [shape: f32[8,8], index: 2, kind: input, shape index: {}]
  %s3 = inlined_call_operand.vmem [shape: u32[2,8,8], index: 3, kind: input, shape index: {}]
  %s4 = inlined_call_operand.hbm [shape: f32[2,8,16], index: 4, kind: output, shape index: {}]
  %s5 = sld [smem:[#allocation0]]
  $region33: #{tpu_custom_call.1} parent=0
    _
  %s7 = ssub.s32 1, %s5
  %s8 = scalar_select 0, %s7, %s5
  $region1: #{tpu_custom_call.1} parent=0
    #allocation2 [shape = 'u8[8192]{0}', space=vmem, size = 0x2000, scoped, tag = 'output window, operand 0, single buffered']
    #allocation3 [shape = 's32[1]{0}', space=sflag, size = 0x4, scoped, tag = 'scoped memory for tpu_custom_call.1']
    %9 = vsyncpa [#allocation3], 0
    // Predicated region
    $region2: #{tpu_custom_call.1} parent=1 // pred_check
      _
    $region3: #{tpu_custom_call.1} parent=1 // pred_check_branch
      %11 = sbr.rel (0) target = $region5
    $region4: #{tpu_custom_call.1} parent=1 // pred_region
      _
    $region5: #{tpu_custom_call.1} parent=1 // pred_fallthru
      _
    // Predicated region
    $region6: #{tpu_custom_call.1} parent=1 // pred_check
      _
    $region7: #{tpu_custom_call.1} parent=1 // pred_check_branch
      %13 = sbr.rel (0) target = $region9
    $region8: #{tpu_custom_call.1} parent=1 // pred_region
      _
    $region9: #{tpu_custom_call.1} parent=1 // pred_fallthru
      _
    // Predicated region
    $region10: #{tpu_custom_call.1} parent=1 // pred_check
      _
    $region11: #{tpu_custom_call.1} parent=1 // pred_check_branch
      %15 = sbr.rel (0) target = $region13
    $region12: #{tpu_custom_call.1} parent=1 // pred_region
      _
    $region13: #{tpu_custom_call.1} parent=1 // pred_fallthru
      _
    // Predicated region
    $region14: #{tpu_custom_call.1} parent=1 // pred_check
      _
    $region15: #{tpu_custom_call.1} parent=1 // pred_check_branch
      %17 = sbr.rel (0) target = $region17
    $region16: #{tpu_custom_call.1} parent=1 // pred_region
      _
    $region17: #{tpu_custom_call.1} parent=1 // pred_fallthru
      _
    %v19 = vld [vmem:[%s1] sm:$0xf]
    %v20 = vld [vmem:[%s1 + $0x4] sm:$0xf]
    %v21 = vld [vmem:[%s1 + $0x8] sm:$0xf]
    %v22 = vld [vmem:[%s1 + $0xc] sm:$0xf]
    %v23 = vld [vmem:[%s1 + $0x10] sm:$0xf]
    %v24 = vld [vmem:[%s1 + $0x14] sm:$0xf]
    %v25 = vld [vmem:[%s1 + $0x18] sm:$0xf]
    %v26 = vld [vmem:[%s1 + $0x1c] sm:$0xf]
    %v27 = vld [vmem:[%s1 + $0x20] sm:$0xf]
    %v28 = vld [vmem:[%s1 + $0x24] sm:$0xf]
    %v29 = vld [vmem:[%s1 + $0x28] sm:$0xf]
    %v30 = vld [vmem:[%s1 + $0x2c] sm:$0xf]
    %v31 = vld [vmem:[%s1 + $0x30] sm:$0xf]
    %v32 = vld [vmem:[%s1 + $0x34] sm:$0xf]
    %v33 = vld [vmem:[%s1 + $0x38] sm:$0xf]
    %v34 = vld [vmem:[%s1 + $0x3c] sm:$0xf]
    %v35 = vld [vmem:[%s1 + $0x40] sm:$0xf]
    %v36 = vld [vmem:[%s1 + $0x44] sm:$0xf]
    %v37 = vld [vmem:[%s1 + $0x48] sm:$0xf]
    %v38 = vld [vmem:[%s1 + $0x4c] sm:$0xf]
    %v39 = vld [vmem:[%s1 + $0x50] sm:$0xf]
    %v40 = vld [vmem:[%s1 + $0x54] sm:$0xf]
    %v41 = vld [vmem:[%s1 + $0x58] sm:$0xf]
    %v42 = vld [vmem:[%s1 + $0x5c] sm:$0xf]
    %v43 = vld [vmem:[%s1 + $0x60] sm:$0xf]
    %v44 = vld [vmem:[%s1 + $0x64] sm:$0xf]
    %v45 = vld [vmem:[%s1 + $0x68] sm:$0xf]
    %v46 = vld [vmem:[%s1 + $0x6c] sm:$0xf]
    %v47 = vld [vmem:[%s1 + $0x70] sm:$0xf]
    %v48 = vld [vmem:[%s1 + $0x74] sm:$0xf]
    %v49 = vld [vmem:[%s1 + $0x78] sm:$0xf]
    %v50 = vld [vmem:[%s1 + $0x7c] sm:$0xf]
    %v51 = vld [vmem:[%s1 + $0x80] sm:$0xf]
    %v52 = vld [vmem:[%s1 + $0x84] sm:$0xf]
    %v53 = vld [vmem:[%s1 + $0x88] sm:$0xf]
    %v54 = vld [vmem:[%s1 + $0x8c] sm:$0xf]
    %v55 = vld [vmem:[%s1 + $0x90] sm:$0xf]
    %v56 = vld [vmem:[%s1 + $0x94] sm:$0xf]
    %v57 = vld [vmem:[%s1 + $0x98] sm:$0xf]
    %v58 = vld [vmem:[%s1 + $0x9c] sm:$0xf]
    %v59 = vld [vmem:[%s1 + $0xa0] sm:$0xf]
    %v60 = vld [vmem:[%s1 + $0xa4] sm:$0xf]
    %v61 = vld [vmem:[%s1 + $0xa8] sm:$0xf]
    %v62 = vld [vmem:[%s1 + $0xac] sm:$0xf]
    %v63 = vld [vmem:[%s1 + $0xb0] sm:$0xf]
    %v64 = vld [vmem:[%s1 + $0xb4] sm:$0xf]
    %v65 = vld [vmem:[%s1 + $0xb8] sm:$0xf]
    %v66 = vld [vmem:[%s1 + $0xbc] sm:$0xf]
    loop: start=0, step=1, limit=2
    $region18: #{tpu_custom_call.1} parent=1 // loop_pre_header
      _
    $region19: #{tpu_custom_call.1} parent=1 // loop_header
      %s68 = sphi 0, %s72
      %p69 = scmp.ge.s32.totalorder %s68, 2
    $region20: #{tpu_custom_call.1} parent=1 // loop_header_branch
      %71 = sbr.rel (%p69) target = $region24
    $region21: #{tpu_custom_call.1} parent=1 // loop_body
      %s73 = smul.u32 %s68, 3
      %s74 = smul.addr %s73, 8
      %s75 = scalar_lea.vmem %s0, %s74
      %v76 = vld [vmem:[%s75] sm:$0xff]
      %v77 = vld [vmem:[%s75 + $0x8] sm:$0xff]
      %v78 = vld [vmem:[%s75 + $0x10] sm:$0xff]
      %v79 = vpack.c.bf16 %v76, %v76
      %v80 = vpack.c.bf16 %v77, %v77
      %v81 = vpack.c.bf16 %v78, %v78
      %v130 = vunpack.c.l.b16 %v19
      %v131 = vunpack.c.l.b16 %v20
      %v132 = vunpack.c.l.b16 %v21
      %v133 = vunpack.c.l.b16 %v22
      %v134 = vunpack.c.l.b16 %v23
      %v135 = vunpack.c.l.b16 %v24
      %v136 = vunpack.c.l.b16 %v25
      %v137 = vunpack.c.l.b16 %v26
      %v138 = vunpack.c.l.b16 %v27
      %v139 = vunpack.c.l.b16 %v28
      %v140 = vunpack.c.l.b16 %v29
      %v141 = vunpack.c.l.b16 %v30
      %v142 = vunpack.c.l.b16 %v31
      %v143 = vunpack.c.l.b16 %v32
      %v144 = vunpack.c.l.b16 %v33
      %v145 = vunpack.c.l.b16 %v34
      %v146 = vunpack.c.l.b16 %v35
      %v147 = vunpack.c.l.b16 %v36
      %v148 = vunpack.c.l.b16 %v37
      %v149 = vunpack.c.l.b16 %v38
      %v150 = vunpack.c.l.b16 %v39
      %v151 = vunpack.c.l.b16 %v40
      %v152 = vunpack.c.l.b16 %v41
      %v153 = vunpack.c.l.b16 %v42
      %v154 = vunpack.c.l.b16 %v43
      %v155 = vunpack.c.l.b16 %v44
      %v156 = vunpack.c.l.b16 %v45
      %v157 = vunpack.c.l.b16 %v46
      %v158 = vunpack.c.l.b16 %v47
      %v159 = vunpack.c.l.b16 %v48
      %v160 = vunpack.c.l.b16 %v49
      %v161 = vunpack.c.l.b16 %v50
      %v162 = vunpack.c.l.b16 %v51
      %v163 = vunpack.c.l.b16 %v52
      %v164 = vunpack.c.l.b16 %v53
      %v165 = vunpack.c.l.b16 %v54
      %v166 = vunpack.c.l.b16 %v55
      %v167 = vunpack.c.l.b16 %v56
      %v168 = vunpack.c.l.b16 %v57
      %v169 = vunpack.c.l.b16 %v58
      %v170 = vunpack.c.l.b16 %v59
      %v171 = vunpack.c.l.b16 %v60
      %v172 = vunpack.c.l.b16 %v61
      %v173 = vunpack.c.l.b16 %v62
      %v174 = vunpack.c.l.b16 %v63
      %v175 = vunpack.c.l.b16 %v64
      %v176 = vunpack.c.l.b16 %v65
      %v177 = vunpack.c.l.b16 %v66
      %v178 = vpack.c.b16 %v131, %v130
      %v179 = vpack.c.b16 %v133, %v132
      %v180 = vpack.c.b16 %v135, %v134
      %v181 = vpack.c.b16 %v137, %v136
      %v182 = vpack.c.b16 %v139, %v138
      %v183 = vpack.c.b16 %v141, %v140
      %v184 = vpack.c.b16 %v143, %v142
      %v185 = vpack.c.b16 %v145, %v144
      %v186 = vpack.c.b16 %v147, %v146
      %v187 = vpack.c.b16 %v149, %v148
      %v188 = vpack.c.b16 %v151, %v150
      %v189 = vpack.c.b16 %v153, %v152
      %v190 = vpack.c.b16 %v155, %v154
      %v191 = vpack.c.b16 %v157, %v156
      %v192 = vpack.c.b16 %v159, %v158
      %v193 = vpack.c.b16 %v161, %v160
      %v194 = vpack.c.b16 %v163, %v162
      %v195 = vpack.c.b16 %v165, %v164
      %v196 = vpack.c.b16 %v167, %v166
      %v197 = vpack.c.b16 %v169, %v168
      %v198 = vpack.c.b16 %v171, %v170
      %v199 = vpack.c.b16 %v173, %v172
      %v200 = vpack.c.b16 %v175, %v174
      %v201 = vpack.c.b16 %v177, %v176
      %226 = vmatprep.subr.bf16.mxu0 0
      %227 = vmatpush1.bf16.msra.mxu0 %v185
      %228 = vmatprep.subr.bf16.mxu0 0
      %229 = vmatpush1.bf16.msra.mxu0 %v184
      %230 = vmatprep.subr.bf16.mxu0 0
      %231 = vmatpush1.bf16.msra.mxu0 %v183
      %232 = vmatprep.subr.bf16.mxu0 0
      %233 = vmatpush1.bf16.msra.mxu0 %v182
      %234 = vmatprep.subr.bf16.mxu0 0
      %235 = vmatpush1.bf16.msra.mxu0 %v181
      %236 = vmatprep.subr.bf16.mxu0 0
      %237 = vmatpush1.bf16.msra.mxu0 %v180
      %238 = vmatprep.subr.bf16.mxu0 0
      %239 = vmatpush1.bf16.msra.mxu0 %v179
      %240 = vmatprep.subr.bf16.mxu0 0
      %241 = vmatpush1.bf16.msra.mxu0 %v178
      %242 = vmatprep.subr.bf16.mxu0 0
      %243 = vmatpush2.bf16.msra.mxu0 %v193
      %244 = vmatprep.subr.bf16.mxu0 0
      %245 = vmatpush2.bf16.msra.mxu0 %v192
      %246 = vmatprep.subr.bf16.mxu0 0
      %247 = vmatpush2.bf16.msra.mxu0 %v191
      %248 = vmatprep.subr.bf16.mxu0 0
      %249 = vmatpush2.bf16.msra.mxu0 %v190
      %250 = vmatprep.subr.bf16.mxu0 0
      %251 = vmatpush2.bf16.msra.mxu0 %v189
      %252 = vmatprep.subr.bf16.mxu0 0
      %253 = vmatpush2.bf16.msra.mxu0 %v188
      %254 = vmatprep.subr.bf16.mxu0 0
      %255 = vmatpush2.bf16.msra.mxu0 %v187
      %256 = vmatprep.subr.bf16.mxu0 0
      %257 = vmatpush2.bf16.msra.mxu0 %v186
      %258 = vmatprep.mubr.bf16.mxu0 %v80
      %259 = vmatmul.mubr.bf16.gmra.mxu0 %v79
      %v260 = vpop.f32.mrf.mxu0
      %v261 = vadd.f32 0.0, %v260
      %v262 = vpop.f32.mrf.mxu0
      %v263 = vpop.f32.mrf.mxu0
      %v264 = vpop.f32.mrf.mxu0
      %265 = vdwg.mxu0
      %266 = vmatprep.subr.bf16.mxu0 0
      %267 = vmatpush1.bf16.msra.mxu0 %v201
      %268 = vmatprep.subr.bf16.mxu0 0
      %269 = vmatpush1.bf16.msra.mxu0 %v200
      %270 = vmatprep.subr.bf16.mxu0 0
      %271 = vmatpush1.bf16.msra.mxu0 %v199
      %272 = vmatprep.subr.bf16.mxu0 0
      %273 = vmatpush1.bf16.msra.mxu0 %v198
      %274 = vmatprep.subr.bf16.mxu0 0
      %275 = vmatpush1.bf16.msra.mxu0 %v197
      %276 = vmatprep.subr.bf16.mxu0 0
      %277 = vmatpush1.bf16.msra.mxu0 %v196
      %278 = vmatprep.subr.bf16.mxu0 0
      %279 = vmatpush1.bf16.msra.mxu0 %v195
      %280 = vmatprep.subr.bf16.mxu0 0
      %281 = vmatpush1.bf16.msra.mxu0 %v194
      %282 = vmatprep.subr.bf16.mxu0 0
      %283 = vmatpush2.bf16.msra.mxu0 0
      %284 = vmatprep.subr.bf16.mxu0 0
      %285 = vmatpush2.bf16.msra.mxu0 0
      %286 = vmatprep.subr.bf16.mxu0 0
      %287 = vmatpush2.bf16.msra.mxu0 0
      %288 = vmatprep.subr.bf16.mxu0 0
      %289 = vmatpush2.bf16.msra.mxu0 0
      %290 = vmatprep.subr.bf16.mxu0 0
      %291 = vmatpush2.bf16.msra.mxu0 0
      %292 = vmatprep.subr.bf16.mxu0 0
      %293 = vmatpush2.bf16.msra.mxu0 0
      %294 = vmatprep.subr.bf16.mxu0 0
      %295 = vmatpush2.bf16.msra.mxu0 0
      %296 = vmatprep.subr.bf16.mxu0 0
      %297 = vmatpush2.bf16.msra.mxu0 0
      %298 = vmatprep.mubr.bf16.mxu0 0
      %299 = vmatmul.mubr.bf16.gmra.mxu0 %v81
      %v300 = vpop.f32.mrf.mxu0
      %v301 = vadd.f32 %v261, %v300
      %v302 = vpop.f32.mrf.mxu0
      %v303 = vpop.f32.mrf.mxu0
      %v304 = vpop.f32.mrf.mxu0
      %305 = vdwg.mxu0
      %v306 = vpack.c.bf16 %v301, %v301
      %308 = vrot.lane.b32.xlu0 %v306, 112
      %v309 = vpop.permute.xlu0 %308
      %vm310 = vcmask 130048
      %v312 = vsel %vm310, %v306, 0
      %v315 = vsel %vm310, %v309, 0
      %317 = vmatprep.subr.bf16.mxu0 0
      %318 = vmatpush1.bf16.xpose.msra.mxu0 0
      %319 = vmatprep.subr.bf16.mxu0 0
      %320 = vmatpush1.bf16.xpose.msra.mxu0 0
      %321 = vmatprep.subr.bf16.mxu0 0
      %322 = vmatpush1.bf16.xpose.msra.mxu0 0
      %323 = vmatprep.subr.bf16.mxu0 0
      %324 = vmatpush1.bf16.xpose.msra.mxu0 0
      %325 = vmatprep.subr.bf16.mxu0 0
      %326 = vmatpush1.bf16.xpose.msra.mxu0 0
      %327 = vmatprep.subr.bf16.mxu0 0
      %328 = vmatpush1.bf16.xpose.msra.mxu0 0
      %329 = vmatprep.subr.bf16.mxu0 0
      %330 = vmatpush1.bf16.xpose.msra.mxu0 0
      %331 = vmatprep.subr.bf16.mxu0 0
      %332 = vmatpush1.bf16.xpose.msra.mxu0 %v315
      %333 = vmatprep.subr.bf16.mxu0 0
      %334 = vmatpush2.bf16.xpose.msra.mxu0 0
      %335 = vmatprep.subr.bf16.mxu0 0
      %336 = vmatpush2.bf16.xpose.msra.mxu0 0
      %337 = vmatprep.subr.bf16.mxu0 0
      %338 = vmatpush2.bf16.xpose.msra.mxu0 0
      %339 = vmatprep.subr.bf16.mxu0 0
      %340 = vmatpush2.bf16.xpose.msra.mxu0 0
      %341 = vmatprep.subr.bf16.mxu0 0
      %342 = vmatpush2.bf16.xpose.msra.mxu0 0
      %343 = vmatprep.subr.bf16.mxu0 0
      %344 = vmatpush2.bf16.xpose.msra.mxu0 0
      %345 = vmatprep.subr.bf16.mxu0 0
      %346 = vmatpush2.bf16.xpose.msra.mxu0 0
      %347 = vmatprep.subr.bf16.mxu0 0
      %348 = vmatpush2.bf16.xpose.msra.mxu0 0
      %349 = vmatprep.mubr.bf16.mxu0 0
      %350 = vmatmul.mubr.bf16.gmra.mxu0 %v312
      %v351 = vpop.f32.mrf.mxu0
      %v352 = vadd.f32 0.0, %v351
      %v353 = vpop.f32.mrf.mxu0
      %v354 = vpop.f32.mrf.mxu0
      %v355 = vpop.f32.mrf.mxu0
      %356 = vdwg.mxu0
      %v357 = vmul.f32 %v352, 0.05103104
      %v358 = vld [vmem:[%s2] sm:$0xff]
      %v359 = vadd.f32 %v357, %v358
      %vm360 = vcmask 64512
      %v361 = vsel %vm360, %v359, -inf
      %362 = vmax.xlane.f32.xlu0 %v361
      %v363 = vpop.xlane.xlu0 %362
      %v364 = vsub.f32 %v359, %v363
      %v365 = vmul.f32 %v364, 1.442695
      %v366 = vpow.pop %v365
      %v367 = vsel %vm360, %v366, 0.0
      %368 = vadd.xlane.f32.xlu0 %v367
      %v369 = vpop.xlane.xlu0 %368
      %v370 = vrcp.pop %v369
      %v371 = vpack.c.bf16 %v366, %v366
      %372 = vrot.lane.b32.xlu0 %v306, 96
      %v373 = vpop.permute.xlu0 %372
      %v375 = vsel %vm360, %v371, 0
      %vm377 = vcmask 1043456
      %v379 = vsel %vm377, %v373, 0
      %381 = vmatprep.subr.bf16.mxu0 0
      %382 = vmatpush1.bf16.msra.mxu0 0
      %383 = vmatprep.subr.bf16.mxu0 0
      %384 = vmatpush1.bf16.msra.mxu0 0
      %385 = vmatprep.subr.bf16.mxu0 0
      %386 = vmatpush1.bf16.msra.mxu0 0
      %387 = vmatprep.subr.bf16.mxu0 0
      %388 = vmatpush1.bf16.msra.mxu0 0
      %389 = vmatprep.subr.bf16.mxu0 0
      %390 = vmatpush1.bf16.msra.mxu0 0
      %391 = vmatprep.subr.bf16.mxu0 0
      %392 = vmatpush1.bf16.msra.mxu0 0
      %393 = vmatprep.subr.bf16.mxu0 0
      %394 = vmatpush1.bf16.msra.mxu0 0
      %395 = vmatprep.subr.bf16.mxu0 0
      %396 = vmatpush1.bf16.msra.mxu0 %v379
      %397 = vmatprep.subr.bf16.mxu0 0
      %398 = vmatpush2.bf16.msra.mxu0 0
      %399 = vmatprep.subr.bf16.mxu0 0
      %400 = vmatpush2.bf16.msra.mxu0 0
      %401 = vmatprep.subr.bf16.mxu0 0
      %402 = vmatpush2.bf16.msra.mxu0 0
      %403 = vmatprep.subr.bf16.mxu0 0
      %404 = vmatpush2.bf16.msra.mxu0 0
      %405 = vmatprep.subr.bf16.mxu0 0
      %406 = vmatpush2.bf16.msra.mxu0 0
      %407 = vmatprep.subr.bf16.mxu0 0
      %408 = vmatpush2.bf16.msra.mxu0 0
      %409 = vmatprep.subr.bf16.mxu0 0
      %410 = vmatpush2.bf16.msra.mxu0 0
      %411 = vmatprep.subr.bf16.mxu0 0
      %412 = vmatpush2.bf16.msra.mxu0 0
      %413 = vmatprep.mubr.bf16.mxu0 0
      %414 = vmatmul.mubr.bf16.gmra.mxu0 %v375
      %v415 = vpop.f32.mrf.mxu0
      %v416 = vadd.f32 0.0, %v415
      %v417 = vpop.f32.mrf.mxu0
      %v418 = vpop.f32.mrf.mxu0
      %v419 = vpop.f32.mrf.mxu0
      %420 = vdwg.mxu0
      %v421 = vmul.f32 %v416, %v370
      %s422 = smul.u32 %s68, 8
      %s423 = scalar_lea.vmem [#allocation2], %s422
      %424 = vst.msk [vmem:[%s423] sm:$0xff] %vm310, %v421
    $region22: #{tpu_custom_call.1} parent=1 // loop_footer
      %s72 = sadd.s32 1, %s68
    $region23: #{tpu_custom_call.1} parent=1 // loop_footer_branch
      %67 = sbr.rel target = $region19
    $region24: #{tpu_custom_call.1} parent=1 // loop_exit
      _
    // Predicated region
    $region25: #{tpu_custom_call.1} parent=1 // pred_check
      _
    $region26: #{tpu_custom_call.1} parent=1 // pred_check_branch
      %426 = sbr.rel (0) target = $region28
    $region27: #{tpu_custom_call.1} parent=1 // pred_region
      %s428 = ssub.s32 256, 256
      %429 = vsyncadd [#allocation3], %s428
      %s430 = sshll.u32 [#allocation2], 4
      %s431 = int_to_ptr.vmem [resolvable:$true] %s430
      %436 = dma.vmem_to_hbm [thread:$0]  %s431, 256, %s4, [#allocation3], 128, 128, 8
    $region28: #{tpu_custom_call.1} parent=1 // pred_fallthru
      _
    // Predicated region
    $region29: #{tpu_custom_call.1} parent=1 // pred_check
      _
    $region30: #{tpu_custom_call.1} parent=1 // pred_check_branch
      %438 = sbr.rel (0) target = $region32
    $region31: #{tpu_custom_call.1} parent=1 // pred_region
      %439 = dma.done [#allocation3], 256
    $region32: #{tpu_custom_call.1} parent=1 // pred_fallthru
      _
    %440 = vsyncpa [#allocation3], 1

</llo_original>
